<compile_context>
chip_gen: v5e
topology: v5e:2x2
jax: 0.10.0
libtpu: 0.0.40
codegen_flags: <defaults>
</compile_context>

<pallas_src>
import jax
import jax.numpy as jnp
from jax.experimental import pallas as pl
from jax.experimental.pallas import tpu as pltpu


def _wlp_kernel(w_ref, *refs):
    # w_ref     : SMEM (L,) f32 -- pre-normalized layer weights (scalar prefetch)
    # refs[:-1] : VMEM (T, lane) -- one tile per layer
    # refs[-1]  : VMEM (T, lane) -- output tile
    *layer_refs, o_ref = refs
    acc = w_ref[0] * layer_refs[0][...].astype(jnp.float32)
    for l in range(1, len(layer_refs)):          # L is small & static -> unrolled
        acc = acc + w_ref[l] * layer_refs[l][...].astype(jnp.float32)
    o_ref[...] = acc.astype(o_ref.dtype)


def _lane_dense_2d(B, S, H):
    """Reshape-only 2-D layout [rows, lane] with lane % 128 == 0 when possible."""
    total = B * S * H
    if H % 128 == 0:
        return B * S, H
    if total % 128 == 0:
        # Widest multiple-of-128 divisor of the flat size, up to 4096 lanes.
        for lane in range(4096, 127, -128):
            if total % lane == 0:
                return total // lane, lane
    # Fallback: correct, but masked partial stores (perf cliff for odd H).
    return B * S, H


def _sublane_multiple(dtype):
    # Native vreg sublane packing: 8 for f32, 16 for bf16, 32 for int8/fp8.
    return max(8, 32 // jnp.dtype(dtype).itemsize)


def _vmem_capacity_bytes():
    try:
        return int(pltpu.get_tpu_info().vmem_capacity_bytes)
    except Exception:
        return 64 * 1024 * 1024      # conservative (v7x-sized) default


def _pick_row_tile(rows, lane, L, dtype):
    """Balanced, sublane-rounded row tile and a generation-aware VMEM limit."""
    itemsize = jnp.dtype(dtype).itemsize
    sub = _sublane_multiple(dtype)

    vmem_cap = _vmem_capacity_bytes()
    if vmem_cap <= 64 * 1024 * 1024:                  # v7x: 64 MiB per TC
        budget, vmem_limit = 24 * 1024 * 1024, 48 * 1024 * 1024
    else:                                             # v5e / v6e: 128 MiB
        budget, vmem_limit = 48 * 1024 * 1024, 96 * 1024 * 1024

    # Double-buffered (L inputs + 1 output) tiles must fit in `budget`.
    per_row = 2 * (L + 1) * lane * itemsize
    t_max = max(sub, (budget // per_row) // sub * sub)

    if rows > sub:
        # >=2 balanced tiles so the "parallel" axis can split over v7x's 2 TCs
        # (neutral on 1-TC v5e/v6e); avoids a near-empty remainder tile too.
        n = max(2, pl.cdiv(rows, t_max))
    else:
        n = 1
    t = pl.cdiv(rows, n)
    t = -(-t // sub) * sub                            # round up to sublane packing
    t = min(t, rows)                                  # full-extent block if tiny
    return t, vmem_limit


def weighted_layer_pooling(all_layer_embeddings, layer_weights, layer_start=4,
                           *, force_pallas=False, min_pallas_bytes=256 * 1024):
    """all_layer_embeddings: list of (num_hidden_layers + 1) arrays [B, S, H]."""
    layers = list(all_layer_embeddings[layer_start:])   # no jnp.stack copy
    L = len(layers)
    B, S, H = layers[0].shape
    out_dtype = layers[0].dtype
    itemsize = jnp.dtype(out_dtype).itemsize

    # Pre-normalize weights -> kernel is pure mul-add (no per-element divide).
    w = layer_weights.astype(jnp.float32)
    w_norm = w / jnp.sum(w)

    # Tiny inputs: plain fused jnp path (pallas launch overhead would dominate).
    if not force_pallas and B * S * H * itemsize < min_pallas_bytes:
        acc = w_norm[0] * layers[0].astype(jnp.float32)
        for l in range(1, L):
            acc = acc + w_norm[l] * layers[l].astype(jnp.float32)
        return acc.astype(out_dtype).reshape(B, S, H)

    # Free reshape to a lane-dense token-major layout.
    rows, lane = _lane_dense_2d(B, S, H)
    xs = [x.reshape(rows, lane) for x in layers]

    t, vmem_limit = _pick_row_tile(rows, lane, L, out_dtype)
    grid = (pl.cdiv(rows, t),)

    tile_spec = pl.BlockSpec((t, lane), lambda i, w_ref: (i, 0))

    cost = pl.CostEstimate(
        flops=(2 * L - 1) * rows * lane,
        transcendentals=0,
        bytes_accessed=(L + 1) * rows * lane * itemsize,
    )

    out = pl.pallas_call(
        _wlp_kernel,
        out_shape=jax.ShapeDtypeStruct((rows, lane), out_dtype),
        grid_spec=pltpu.PrefetchScalarGridSpec(
            num_scalar_prefetch=1,            # w_norm -> SMEM
            grid=grid,
            in_specs=[tile_spec] * L,         # L separate inputs; default Buffered(2)
            out_specs=tile_spec,
        ),
        compiler_params=pltpu.CompilerParams(
            dimension_semantics=("parallel",),      # megacore-shardable token tiles
            vmem_limit_bytes=vmem_limit,            # generation-aware headroom
        ),
        cost_estimate=cost,
    )(w_norm, *xs)

    return out.reshape(B, S, H)


if __name__ == "__main__":
    # Module config (matches nn.Module __init__ defaults)
    num_hidden_layers = 12
    layer_start = 4
    L_used = num_hidden_layers + 1 - layer_start       # 9

    # Small shapes implied by the forward pass: [B, S, H] token embeddings.
    B, S, H = 2, 8, 32

    key = jax.random.PRNGKey(0)
    keys = jax.random.split(key, num_hidden_layers + 1)
    all_layer_embeddings = [
        jax.random.normal(k, (B, S, H), dtype=jnp.float32) for k in keys
    ]

    # Deterministic parameter init: torch.tensor([1] * L_used, dtype=float)
    layer_weights = jnp.ones((L_used,), dtype=jnp.float32)

    # Pure-JAX reference
    stacked = jnp.stack(all_layer_embeddings)[layer_start:]         # [L, B, S, H]
    ref = (layer_weights[:, None, None, None] * stacked).sum(axis=0) / layer_weights.sum()

    # 1) Auto path: tiny input takes the fused-jnp fallback.
    out_auto = jax.block_until_ready(
        weighted_layer_pooling(all_layer_embeddings, layer_weights, layer_start))
    assert out_auto.shape == (B, S, H)
    assert jnp.allclose(out_auto, ref, atol=1e-5, rtol=1e-5)

    # 2) Force the Pallas kernel on the same small input (single full-extent block).
    out_small = jax.block_until_ready(
        weighted_layer_pooling(all_layer_embeddings, layer_weights, layer_start,
                               force_pallas=True))
    assert jnp.allclose(out_small, ref, atol=1e-5, rtol=1e-5)

    # 3) Slightly larger input: exercises the lane-dense layout + >=2-step parallel grid.
    B2, S2, H2 = 2, 64, 256
    keys2 = jax.random.split(jax.random.PRNGKey(1), num_hidden_layers + 1)
    layers2 = [jax.random.normal(k, (B2, S2, H2), dtype=jnp.float32) for k in keys2]
    out2 = jax.block_until_ready(
        weighted_layer_pooling(layers2, layer_weights, layer_start, force_pallas=True))
    stacked2 = jnp.stack(layers2)[layer_start:]
    ref2 = (layer_weights[:, None, None, None] * stacked2).sum(axis=0) / layer_weights.sum()
    assert out2.shape == (B2, S2, H2)
    assert jnp.allclose(out2, ref2, atol=1e-5, rtol=1e-5)

    # Mimic `features.update({'token_embeddings': ...})` (plain-Python glue)
    features = {"all_layer_embeddings": all_layer_embeddings}
    features.update({"token_embeddings": out_auto})

    print("KERNEL_OK")
</pallas_src>

<mosaic_0001>
module attributes {stable_mosaic.version = 11 : i64} {
  func.func @_wlp_kernel(%arg0: i32, %arg1: memref<9xf32, #tpu.memory_space<smem>>, %arg2: memref<1x512xf32, #tpu.memory_space<vmem>>, %arg3: memref<1x512xf32, #tpu.memory_space<vmem>>, %arg4: memref<1x512xf32, #tpu.memory_space<vmem>>, %arg5: memref<1x512xf32, #tpu.memory_space<vmem>>, %arg6: memref<1x512xf32, #tpu.memory_space<vmem>>, %arg7: memref<1x512xf32, #tpu.memory_space<vmem>>, %arg8: memref<1x512xf32, #tpu.memory_space<vmem>>, %arg9: memref<1x512xf32, #tpu.memory_space<vmem>>, %arg10: memref<1x512xf32, #tpu.memory_space<vmem>>, %arg11: memref<1x512xf32, #tpu.memory_space<vmem>>) attributes {dimension_semantics = [#tpu.dimension_semantics<parallel>], iteration_bounds = array<i64: 1>, scalar_prefetch = 1 : i64, scratch_operands = 0 : i64, tpu.core_type = #tpu.core_type<tc>, window_params = [{transform_indices = @transform_0, window_bounds = array<i64: 1, 512>}, {transform_indices = @transform_1, window_bounds = array<i64: 1, 512>}, {transform_indices = @transform_2, window_bounds = array<i64: 1, 512>}, {transform_indices = @transform_3, window_bounds = array<i64: 1, 512>}, {transform_indices = @transform_4, window_bounds = array<i64: 1, 512>}, {transform_indices = @transform_5, window_bounds = array<i64: 1, 512>}, {transform_indices = @transform_6, window_bounds = array<i64: 1, 512>}, {transform_indices = @transform_7, window_bounds = array<i64: 1, 512>}, {transform_indices = @transform_8, window_bounds = array<i64: 1, 512>}, {transform_indices = @transform_9, window_bounds = array<i64: 1, 512>}]} {
    %c0 = arith.constant 0 : index
    %0 = memref.load %arg1[%c0] : memref<9xf32, #tpu.memory_space<smem>>
    %c0_0 = arith.constant 0 : index
    %c0_1 = arith.constant 0 : index
    %1 = vector.load %arg2[%c0_0, %c0_1] : memref<1x512xf32, #tpu.memory_space<vmem>>, vector<1x512xf32>
    %2 = vector.broadcast %0 : f32 to vector<1x512xf32>
    %3 = arith.mulf %2, %1 : vector<1x512xf32>
    %c1 = arith.constant 1 : index
    %4 = memref.load %arg1[%c1] : memref<9xf32, #tpu.memory_space<smem>>
    %c0_2 = arith.constant 0 : index
    %c0_3 = arith.constant 0 : index
    %5 = vector.load %arg3[%c0_2, %c0_3] : memref<1x512xf32, #tpu.memory_space<vmem>>, vector<1x512xf32>
    %6 = vector.broadcast %4 : f32 to vector<1x512xf32>
    %7 = arith.mulf %6, %5 : vector<1x512xf32>
    %8 = arith.addf %3, %7 : vector<1x512xf32>
    %c2 = arith.constant 2 : index
    %9 = memref.load %arg1[%c2] : memref<9xf32, #tpu.memory_space<smem>>
    %c0_4 = arith.constant 0 : index
    %c0_5 = arith.constant 0 : index
    %10 = vector.load %arg4[%c0_4, %c0_5] : memref<1x512xf32, #tpu.memory_space<vmem>>, vector<1x512xf32>
    %11 = vector.broadcast %9 : f32 to vector<1x512xf32>
    %12 = arith.mulf %11, %10 : vector<1x512xf32>
    %13 = arith.addf %8, %12 : vector<1x512xf32>
    %c3 = arith.constant 3 : index
    %14 = memref.load %arg1[%c3] : memref<9xf32, #tpu.memory_space<smem>>
    %c0_6 = arith.constant 0 : index
    %c0_7 = arith.constant 0 : index
    %15 = vector.load %arg5[%c0_6, %c0_7] : memref<1x512xf32, #tpu.memory_space<vmem>>, vector<1x512xf32>
    %16 = vector.broadcast %14 : f32 to vector<1x512xf32>
    %17 = arith.mulf %16, %15 : vector<1x512xf32>
    %18 = arith.addf %13, %17 : vector<1x512xf32>
    %c4 = arith.constant 4 : index
    %19 = memref.load %arg1[%c4] : memref<9xf32, #tpu.memory_space<smem>>
    %c0_8 = arith.constant 0 : index
    %c0_9 = arith.constant 0 : index
    %20 = vector.load %arg6[%c0_8, %c0_9] : memref<1x512xf32, #tpu.memory_space<vmem>>, vector<1x512xf32>
    %21 = vector.broadcast %19 : f32 to vector<1x512xf32>
    %22 = arith.mulf %21, %20 : vector<1x512xf32>
    %23 = arith.addf %18, %22 : vector<1x512xf32>
    %c5 = arith.constant 5 : index
    %24 = memref.load %arg1[%c5] : memref<9xf32, #tpu.memory_space<smem>>
    %c0_10 = arith.constant 0 : index
    %c0_11 = arith.constant 0 : index
    %25 = vector.load %arg7[%c0_10, %c0_11] : memref<1x512xf32, #tpu.memory_space<vmem>>, vector<1x512xf32>
    %26 = vector.broadcast %24 : f32 to vector<1x512xf32>
    %27 = arith.mulf %26, %25 : vector<1x512xf32>
    %28 = arith.addf %23, %27 : vector<1x512xf32>
    %c6 = arith.constant 6 : index
    %29 = memref.load %arg1[%c6] : memref<9xf32, #tpu.memory_space<smem>>
    %c0_12 = arith.constant 0 : index
    %c0_13 = arith.constant 0 : index
    %30 = vector.load %arg8[%c0_12, %c0_13] : memref<1x512xf32, #tpu.memory_space<vmem>>, vector<1x512xf32>
    %31 = vector.broadcast %29 : f32 to vector<1x512xf32>
    %32 = arith.mulf %31, %30 : vector<1x512xf32>
    %33 = arith.addf %28, %32 : vector<1x512xf32>
    %c7 = arith.constant 7 : index
    %34 = memref.load %arg1[%c7] : memref<9xf32, #tpu.memory_space<smem>>
    %c0_14 = arith.constant 0 : index
    %c0_15 = arith.constant 0 : index
    %35 = vector.load %arg9[%c0_14, %c0_15] : memref<1x512xf32, #tpu.memory_space<vmem>>, vector<1x512xf32>
    %36 = vector.broadcast %34 : f32 to vector<1x512xf32>
    %37 = arith.mulf %36, %35 : vector<1x512xf32>
    %38 = arith.addf %33, %37 : vector<1x512xf32>
    %c8 = arith.constant 8 : index
    %39 = memref.load %arg1[%c8] : memref<9xf32, #tpu.memory_space<smem>>
    %c0_16 = arith.constant 0 : index
    %c0_17 = arith.constant 0 : index
    %40 = vector.load %arg10[%c0_16, %c0_17] : memref<1x512xf32, #tpu.memory_space<vmem>>, vector<1x512xf32>
    %41 = vector.broadcast %39 : f32 to vector<1x512xf32>
    %42 = arith.mulf %41, %40 : vector<1x512xf32>
    %43 = arith.addf %38, %42 : vector<1x512xf32>
    %c0_18 = arith.constant 0 : index
    %c0_19 = arith.constant 0 : index
    %44 = vector.load %arg11[%c0_18, %c0_19] : memref<1x512xf32, #tpu.memory_space<vmem>>, vector<1x512xf32>
    tpu.vector_store %arg11[%c0_18, %c0_19], %43 {strides = array<i32>} : memref<1x512xf32, #tpu.memory_space<vmem>>, vector<1x512xf32>,
    return
  }
  func.func @transform_0(%arg0: i32, %arg1: memref<9xf32, #tpu.memory_space<smem>>) -> (i32, i32) {
    %c0_i32 = arith.constant 0 : i32
    %c0_i32_0 = arith.constant 0 : i32
    return %arg0, %c0_i32 : i32, i32
  }
  func.func @transform_1(%arg0: i32, %arg1: memref<9xf32, #tpu.memory_space<smem>>) -> (i32, i32) {
    %c0_i32 = arith.constant 0 : i32
    %c0_i32_0 = arith.constant 0 : i32
    return %arg0, %c0_i32 : i32, i32
  }
  func.func @transform_2(%arg0: i32, %arg1: memref<9xf32, #tpu.memory_space<smem>>) -> (i32, i32) {
    %c0_i32 = arith.constant 0 : i32
    %c0_i32_0 = arith.constant 0 : i32
    return %arg0, %c0_i32 : i32, i32
  }
  func.func @transform_3(%arg0: i32, %arg1: memref<9xf32, #tpu.memory_space<smem>>) -> (i32, i32) {
    %c0_i32 = arith.constant 0 : i32
    %c0_i32_0 = arith.constant 0 : i32
    return %arg0, %c0_i32 : i32, i32
  }
  func.func @transform_4(%arg0: i32, %arg1: memref<9xf32, #tpu.memory_space<smem>>) -> (i32, i32) {
    %c0_i32 = arith.constant 0 : i32
    %c0_i32_0 = arith.constant 0 : i32
    return %arg0, %c0_i32 : i32, i32
  }
  func.func @transform_5(%arg0: i32, %arg1: memref<9xf32, #tpu.memory_space<smem>>) -> (i32, i32) {
    %c0_i32 = arith.constant 0 : i32
    %c0_i32_0 = arith.constant 0 : i32
    return %arg0, %c0_i32 : i32, i32
  }
  func.func @transform_6(%arg0: i32, %arg1: memref<9xf32, #tpu.memory_space<smem>>) -> (i32, i32) {
    %c0_i32 = arith.constant 0 : i32
    %c0_i32_0 = arith.constant 0 : i32
    return %arg0, %c0_i32 : i32, i32
  }
  func.func @transform_7(%arg0: i32, %arg1: memref<9xf32, #tpu.memory_space<smem>>) -> (i32, i32) {
    %c0_i32 = arith.constant 0 : i32
    %c0_i32_0 = arith.constant 0 : i32
    return %arg0, %c0_i32 : i32, i32
  }
  func.func @transform_8(%arg0: i32, %arg1: memref<9xf32, #tpu.memory_space<smem>>) -> (i32, i32) {
    %c0_i32 = arith.constant 0 : i32
    %c0_i32_0 = arith.constant 0 : i32
    return %arg0, %c0_i32 : i32, i32
  }
  func.func @transform_9(%arg0: i32, %arg1: memref<9xf32, #tpu.memory_space<smem>>) -> (i32, i32) {
    %c0_i32 = arith.constant 0 : i32
    %c0_i32_0 = arith.constant 0 : i32
    return %arg0, %c0_i32 : i32, i32
  }
}

</mosaic_0001>

<llo_original>
// kernel: tpu_custom_call.1
$region0: #{tpu_custom_call.1}
  #allocation0 [shape = 'u32[]', space=smem, size = 0x4, offset = 0x4, fixed_abs, tag = 'smem constant byte address 0x4 - core index']
  #allocation1 [shape = 'u32[72,128]{1,0:T(1,128)}', space=vmem, size = 0x9000, scoped, tag = 'internal scratch']
  #allocation2 [shape = 's32[1]{0}', space=sflag, size = 0x4, scoped, tag = 'scoped memory for tpu_custom_call.1']
  #allocation3 [shape = 'u8[512]{0}', space=smem, size = 0x200, scoped, tag = 'prefetched SMEM operand 0']
  %s0 = inlined_call_operand.hbm [shape: f32[9], index: 0, kind: input, shape index: {}]
  %s1 = inlined_call_operand.hbm [shape: f32[1,512], index: 1, kind: input, shape index: {}]
  %s2 = inlined_call_operand.hbm [shape: f32[1,512], index: 2, kind: input, shape index: {}]
  %s3 = inlined_call_operand.hbm [shape: f32[1,512], index: 3, kind: input, shape index: {}]
  %s4 = inlined_call_operand.hbm [shape: f32[1,512], index: 4, kind: input, shape index: {}]
  %s5 = inlined_call_operand.vmem [shape: f32[1,512], index: 5, kind: input, shape index: {}]
  %s6 = inlined_call_operand.hbm [shape: f32[1,512], index: 6, kind: input, shape index: {}]
  %s7 = inlined_call_operand.hbm [shape: f32[1,512], index: 7, kind: input, shape index: {}]
  %s8 = inlined_call_operand.hbm [shape: f32[1,512], index: 8, kind: input, shape index: {}]
  %s9 = inlined_call_operand.vmem [shape: f32[1,512], index: 9, kind: input, shape index: {}]
  %s10 = inlined_call_operand.hbm [shape: f32[1,512], index: 10, kind: output, shape index: {}]
  %s11 = sld [smem:[#allocation0]]
  $region74: #{tpu_custom_call.1} parent=0
    _
  %s13 = ssub.s32 1, %s11
  %s14 = scalar_select 0, %s13, %s11
  %s16 = sshll.u32 %s0, 4
  %s17 = int_to_ptr.hbm [resolvable:$true] %s16
  %19 = dma.hbm_to_smem %s17, 16, [#allocation3], [#allocation2]
  %21 = dma.done [#allocation2], 16
  %22 = sfence
  $region1: #{tpu_custom_call.1} parent=0
    #allocation4 [shape = 'u8[2048]{0}', space=vmem, size = 0x800, scoped, tag = 'input window, operand 1, single buffered']
    #allocation5 [shape = 's32[1]{0}', space=sflag, size = 0x4, scoped, tag = 'scoped memory for tpu_custom_call.1']
    #allocation6 [shape = 's32[1]{0}', space=sflag, size = 0x4, scoped, tag = 'scoped memory for tpu_custom_call.1']
    #allocation7 [shape = 'u8[2048]{0}', space=vmem, size = 0x800, scoped, tag = 'input window, operand 2, single buffered']
    #allocation8 [shape = 's32[1]{0}', space=sflag, size = 0x4, scoped, tag = 'scoped memory for tpu_custom_call.1']
    #allocation9 [shape = 'u8[2048]{0}', space=vmem, size = 0x800, scoped, tag = 'input window, operand 3, single buffered']
    #allocation10 [shape = 'u8[2048]{0}', space=vmem, size = 0x800, scoped, tag = 'input window, operand 4, single buffered']
    #allocation11 [shape = 's32[1]{0}', space=sflag, size = 0x4, scoped, tag = 'scoped memory for tpu_custom_call.1']
    #allocation12 [shape = 'u8[2048]{0}', space=vmem, size = 0x800, scoped, tag = 'input window, operand 6, single buffered']
    #allocation13 [shape = 'u8[2048]{0}', space=vmem, size = 0x800, scoped, tag = 'input window, operand 7, single buffered']
    #allocation14 [shape = 's32[1]{0}', space=sflag, size = 0x4, scoped, tag = 'scoped memory for tpu_custom_call.1']
    #allocation15 [shape = 'u8[2048]{0}', space=vmem, size = 0x800, scoped, tag = 'input window, operand 8, single buffered']
    #allocation16 [shape = 'u8[2048]{0}', space=vmem, size = 0x800, scoped, tag = 'output window, operand 0, single buffered']
    %23 = vsyncpa [#allocation5], 0
    %24 = vsyncpa [#allocation8], 0
    %25 = vsyncpa [#allocation11], 0
    %26 = vsyncpa [#allocation14], 0
    %27 = vsyncpa [#allocation6], 0
    // Predicated region
    $region2: #{tpu_custom_call.1} parent=1 // pred_check
      _
    $region3: #{tpu_custom_call.1} parent=1 // pred_check_branch
      %29 = sbr.rel (0) target = $region5
    $region4: #{tpu_custom_call.1} parent=1 // pred_region
      %31 = vsyncadd [#allocation5], 0
      %s33 = sshll.u32 %s1, 4
      %s34 = int_to_ptr.hbm [resolvable:$true] %s33
      %s35 = sshll.u32 [#allocation4], 4
      %s36 = int_to_ptr.vmem [resolvable:$true] %s35
      %38 = dma.hbm_to_vmem [thread:$0]  %s34, 64, %s36, [#allocation5]
    $region5: #{tpu_custom_call.1} parent=1 // pred_fallthru
      _
    // Predicated region
    $region6: #{tpu_custom_call.1} parent=1 // pred_check
      _
    $region7: #{tpu_custom_call.1} parent=1 // pred_check_branch
      %40 = sbr.rel (0) target = $region9
    $region8: #{tpu_custom_call.1} parent=1 // pred_region
      %42 = vsyncadd [#allocation8], 0
      %s44 = sshll.u32 %s2, 4
      %s45 = int_to_ptr.hbm [resolvable:$true] %s44
      %s46 = sshll.u32 [#allocation7], 4
      %s47 = int_to_ptr.vmem [resolvable:$true] %s46
      %49 = dma.hbm_to_vmem [thread:$0]  %s45, 64, %s47, [#allocation8]
    $region9: #{tpu_custom_call.1} parent=1 // pred_fallthru
      _
    // Predicated region
    $region10: #{tpu_custom_call.1} parent=1 // pred_check
      _
    $region11: #{tpu_custom_call.1} parent=1 // pred_check_branch
      %51 = sbr.rel (0) target = $region13
    $region12: #{tpu_custom_call.1} parent=1 // pred_region
      %53 = vsyncadd [#allocation8], 0
      %s55 = sshll.u32 %s3, 4
      %s56 = int_to_ptr.hbm [resolvable:$true] %s55
      %s57 = sshll.u32 [#allocation9], 4
      %s58 = int_to_ptr.vmem [resolvable:$true] %s57
      %60 = dma.hbm_to_vmem [thread:$0]  %s56, 64, %s58, [#allocation8]
    $region13: #{tpu_custom_call.1} parent=1 // pred_fallthru
      _
    // Predicated region
    $region14: #{tpu_custom_call.1} parent=1 // pred_check
      _
    $region15: #{tpu_custom_call.1} parent=1 // pred_check_branch
      %62 = sbr.rel (0) target = $region17
    $region16: #{tpu_custom_call.1} parent=1 // pred_region
      %64 = vsyncadd [#allocation11], 0
      %s66 = sshll.u32 %s4, 4
      %s67 = int_to_ptr.hbm [resolvable:$true] %s66
      %s68 = sshll.u32 [#allocation10], 4
      %s69 = int_to_ptr.vmem [resolvable:$true] %s68
      %71 = dma.hbm_to_vmem [thread:$0]  %s67, 64, %s69, [#allocation11]
    $region17: #{tpu_custom_call.1} parent=1 // pred_fallthru
      _
    // Predicated region
    $region18: #{tpu_custom_call.1} parent=1 // pred_check
      _
    $region19: #{tpu_custom_call.1} parent=1 // pred_check_branch
      %73 = sbr.rel (0) target = $region21
    $region20: #{tpu_custom_call.1} parent=1 // pred_region
      _
    $region21: #{tpu_custom_call.1} parent=1 // pred_fallthru
      _
    // Predicated region
    $region22: #{tpu_custom_call.1} parent=1 // pred_check
      _
    $region23: #{tpu_custom_call.1} parent=1 // pred_check_branch
      %75 = sbr.rel (0) target = $region25
    $region24: #{tpu_custom_call.1} parent=1 // pred_region
      %77 = vsyncadd [#allocation11], 0
      %s79 = sshll.u32 %s6, 4
      %s80 = int_to_ptr.hbm [resolvable:$true] %s79
      %s81 = sshll.u32 [#allocation12], 4
      %s82 = int_to_ptr.vmem [resolvable:$true] %s81
      %84 = dma.hbm_to_vmem [thread:$0]  %s80, 64, %s82, [#allocation11]
    $region25: #{tpu_custom_call.1} parent=1 // pred_fallthru
      _
    // Predicated region
    $region26: #{tpu_custom_call.1} parent=1 // pred_check
      _
    $region27: #{tpu_custom_call.1} parent=1 // pred_check_branch
      %86 = sbr.rel (0) target = $region29
    $region28: #{tpu_custom_call.1} parent=1 // pred_region
      %88 = vsyncadd [#allocation14], 0
      %s90 = sshll.u32 %s7, 4
      %s91 = int_to_ptr.hbm [resolvable:$true] %s90
      %s92 = sshll.u32 [#allocation13], 4
      %s93 = int_to_ptr.vmem [resolvable:$true] %s92
      %95 = dma.hbm_to_vmem [thread:$0]  %s91, 64, %s93, [#allocation14]
    $region29: #{tpu_custom_call.1} parent=1 // pred_fallthru
      _
    // Predicated region
    $region30: #{tpu_custom_call.1} parent=1 // pred_check
      _
    $region31: #{tpu_custom_call.1} parent=1 // pred_check_branch
      %97 = sbr.rel (0) target = $region33
    $region32: #{tpu_custom_call.1} parent=1 // pred_region
      %99 = vsyncadd [#allocation14], 0
      %s101 = sshll.u32 %s8, 4
      %s102 = int_to_ptr.hbm [resolvable:$true] %s101
      %s103 = sshll.u32 [#allocation15], 4
      %s104 = int_to_ptr.vmem [resolvable:$true] %s103
      %106 = dma.hbm_to_vmem [thread:$0]  %s102, 64, %s104, [#allocation14]
    $region33: #{tpu_custom_call.1} parent=1 // pred_fallthru
      _
    // Predicated region
    $region34: #{tpu_custom_call.1} parent=1 // pred_check
      _
    $region35: #{tpu_custom_call.1} parent=1 // pred_check_branch
      %108 = sbr.rel (0) target = $region37
    $region36: #{tpu_custom_call.1} parent=1 // pred_region
      _
    $region37: #{tpu_custom_call.1} parent=1 // pred_fallthru
      _
    // Predicated region
    $region38: #{tpu_custom_call.1} parent=1 // pred_check
      _
    $region39: #{tpu_custom_call.1} parent=1 // pred_check_branch
      %110 = sbr.rel (0) target = $region41
    $region40: #{tpu_custom_call.1} parent=1 // pred_region
      %112 = dma.done [#allocation5], 64
    $region41: #{tpu_custom_call.1} parent=1 // pred_fallthru
      _
    // Predicated region
    $region42: #{tpu_custom_call.1} parent=1 // pred_check
      _
    $region43: #{tpu_custom_call.1} parent=1 // pred_check_branch
      %114 = sbr.rel (0) target = $region45
    $region44: #{tpu_custom_call.1} parent=1 // pred_region
      %116 = dma.done [#allocation8], 64
    $region45: #{tpu_custom_call.1} parent=1 // pred_fallthru
      _
    // Predicated region
    $region46: #{tpu_custom_call.1} parent=1 // pred_check
      _
    $region47: #{tpu_custom_call.1} parent=1 // pred_check_branch
      %118 = sbr.rel (0) target = $region49
    $region48: #{tpu_custom_call.1} parent=1 // pred_region
      %120 = dma.done [#allocation8], 64
    $region49: #{tpu_custom_call.1} parent=1 // pred_fallthru
      _
    // Predicated region
    $region50: #{tpu_custom_call.1} parent=1 // pred_check
      _
    $region51: #{tpu_custom_call.1} parent=1 // pred_check_branch
      %122 = sbr.rel (0) target = $region53
    $region52: #{tpu_custom_call.1} parent=1 // pred_region
      %124 = dma.done [#allocation11], 64
    $region53: #{tpu_custom_call.1} parent=1 // pred_fallthru
      _
    // Predicated region
    $region54: #{tpu_custom_call.1} parent=1 // pred_check
      _
    $region55: #{tpu_custom_call.1} parent=1 // pred_check_branch
      %126 = sbr.rel (0) target = $region57
    $region56: #{tpu_custom_call.1} parent=1 // pred_region
      %128 = dma.done [#allocation11], 64
    $region57: #{tpu_custom_call.1} parent=1 // pred_fallthru
      _
    // Predicated region
    $region58: #{tpu_custom_call.1} parent=1 // pred_check
      _
    $region59: #{tpu_custom_call.1} parent=1 // pred_check_branch
      %130 = sbr.rel (0) target = $region61
    $region60: #{tpu_custom_call.1} parent=1 // pred_region
      %132 = dma.done [#allocation14], 64
    $region61: #{tpu_custom_call.1} parent=1 // pred_fallthru
      _
    // Predicated region
    $region62: #{tpu_custom_call.1} parent=1 // pred_check
      _
    $region63: #{tpu_custom_call.1} parent=1 // pred_check_branch
      %134 = sbr.rel (0) target = $region65
    $region64: #{tpu_custom_call.1} parent=1 // pred_region
      %136 = dma.done [#allocation14], 64
    $region65: #{tpu_custom_call.1} parent=1 // pred_fallthru
      _
    %s137 = sld [smem:[#allocation3]]
    %v138 = vld [vmem:[#allocation4] sm:$0xf]
    %v139 = vstv %s137
    %v140 = vmul.f32 %v139, %v138
    %s141 = sld [smem:[#allocation3 + $0x1]]
    %v142 = vld [vmem:[#allocation7] sm:$0xf]
    %v143 = vstv %s141
    %v144 = vmul.f32 %v143, %v142
    %v145 = vadd.f32 %v140, %v144
    %s146 = sld [smem:[#allocation3 + $0x2]]
    %v147 = vld [vmem:[#allocation9] sm:$0xf]
    %v148 = vstv %s146
    %v149 = vmul.f32 %v148, %v147
    %v150 = vadd.f32 %v145, %v149
    %s151 = sld [smem:[#allocation3 + $0x3]]
    %v152 = vld [vmem:[#allocation10] sm:$0xf]
    %v153 = vstv %s151
    %v154 = vmul.f32 %v153, %v152
    %v155 = vadd.f32 %v150, %v154
    %s156 = sld [smem:[#allocation3 + $0x4]]
    %v157 = vld [vmem:[%s5] sm:$0xf]
    %v158 = vstv %s156
    %v159 = vmul.f32 %v158, %v157
    %v160 = vadd.f32 %v155, %v159
    %s161 = sld [smem:[#allocation3 + $0x5]]
    %v162 = vld [vmem:[#allocation12] sm:$0xf]
    %v163 = vstv %s161
    %v164 = vmul.f32 %v163, %v162
    %v165 = vadd.f32 %v160, %v164
    %s166 = sld [smem:[#allocation3 + $0x6]]
    %v167 = vld [vmem:[#allocation13] sm:$0xf]
    %v168 = vstv %s166
    %v169 = vmul.f32 %v168, %v167
    %v170 = vadd.f32 %v165, %v169
    %s171 = sld [smem:[#allocation3 + $0x7]]
    %v172 = vld [vmem:[#allocation15] sm:$0xf]
    %v173 = vstv %s171
    %v174 = vmul.f32 %v173, %v172
    %v175 = vadd.f32 %v170, %v174
    %s176 = sld [smem:[#allocation3 + $0x8]]
    %v177 = vld [vmem:[%s9] sm:$0xf]
    %v178 = vstv %s176
    %v179 = vmul.f32 %v178, %v177
    %v180 = vadd.f32 %v175, %v179
    %v181 = vlaneseq
    %vm182 = vcmp.ge.s32.totalorder %v181, 0
    %vm183 = vcmp.lt.s32.totalorder %v181, 512
    %vm184 = vmand %vm182, %vm183
    %185 = vst.msk [vmem:[#allocation16] sm:$0xf] %vm184, %v180
    // Predicated region
    $region66: #{tpu_custom_call.1} parent=1 // pred_check
      _
    $region67: #{tpu_custom_call.1} parent=1 // pred_check_branch
      %187 = sbr.rel (0) target = $region69
    $region68: #{tpu_custom_call.1} parent=1 // pred_region
      %189 = vsyncadd [#allocation6], 0
      %s191 = sshll.u32 [#allocation16], 4
      %s192 = int_to_ptr.vmem [resolvable:$true] %s191
      %s193 = sshll.u32 %s10, 4
      %s194 = int_to_ptr.hbm [resolvable:$true] %s193
      %196 = dma.vmem_to_hbm [thread:$0]  %s192, 64, %s194, [#allocation6]
    $region69: #{tpu_custom_call.1} parent=1 // pred_fallthru
      _
    // Predicated region
    $region70: #{tpu_custom_call.1} parent=1 // pred_check
      _
    $region71: #{tpu_custom_call.1} parent=1 // pred_check_branch
      %198 = sbr.rel (0) target = $region73
    $region72: #{tpu_custom_call.1} parent=1 // pred_region
      %200 = dma.done [#allocation6], 64
    $region73: #{tpu_custom_call.1} parent=1 // pred_fallthru
      _
    %201 = vsyncpa [#allocation5], 1
    %202 = vsyncpa [#allocation8], 1
    %203 = vsyncpa [#allocation11], 1
    %204 = vsyncpa [#allocation14], 1
    %205 = vsyncpa [#allocation6], 1

</llo_original>
